<compile_context>
chip_gen: v5e
topology: v5e:2x2
jax: 0.10.0
libtpu: 0.0.40
codegen_flags: <defaults>
</compile_context>

<pallas_src>
import functools

import jax
import jax.numpy as jnp
from jax.experimental import pallas as pl
from jax.experimental.pallas import tpu as pltpu

EPS = 1e-5  # PyTorch nn.LayerNorm default


def _round_up(x, m):
    return ((x + m - 1) // m) * m


def prenorm_kernel(x_ref, gamma_ref, beta_ref, w_ref, b_ref, o_ref):
    """One row-tile of tokens: LayerNorm over last dim (f32), then Linear (bf16 MXU)."""
    x = x_ref[...].astype(jnp.float32)                      # (tile_rows, D)

    # --- LayerNorm over the last axis (biased variance, like PyTorch) ---
    mean = jnp.mean(x, axis=-1, keepdims=True)
    xc = x - mean
    var = jnp.mean(xc * xc, axis=-1, keepdims=True)
    inv = jax.lax.rsqrt(var + EPS)
    y = xc * inv * gamma_ref[...].astype(jnp.float32) + beta_ref[...].astype(jnp.float32)

    # --- fn: Linear(dim -> dim) on the MXU, bf16 inputs, f32 accumulation ---
    out = jnp.dot(y.astype(w_ref.dtype), w_ref[...],
                  preferred_element_type=jnp.float32)
    out = out + b_ref[...].astype(jnp.float32)
    o_ref[...] = out.astype(o_ref.dtype)


@functools.partial(jax.jit, static_argnames=("tile_rows",))
def prenorm_linear(x, gamma, beta, w, b, *, tile_rows=512):
    """x: (B, N, D). Returns fn(LayerNorm(x)) with fn = Linear(D, D)."""
    B, N, D = x.shape
    rows = B * N

    # Row tile: big enough to fill the MXU / hide per-step overhead, but no
    # bigger than the (sublane-rounded) problem.  16 covers f32 (8) and bf16
    # (16) sublane tiling.
    sub = 16
    tr = min(_round_up(tile_rows, sub), _round_up(rows, sub))
    rows_p = _round_up(rows, tr)
    grid = (rows_p // tr,)

    x2 = x.reshape(rows, D)
    if rows_p != rows:
        x2 = jnp.pad(x2, ((0, rows_p - rows), (0, 0)))

    gamma2 = gamma.reshape(1, D)
    beta2 = beta.reshape(1, D)
    b2 = b.reshape(1, D)
    w_m = w.astype(jnp.bfloat16)   # bf16 weights: half the DMA/VMEM, MXU-peak path

    out = pl.pallas_call(
        prenorm_kernel,
        out_shape=jax.ShapeDtypeStruct((rows_p, D), x.dtype),
        grid_spec=pltpu.PrefetchScalarGridSpec(
            num_scalar_prefetch=0,
            grid=grid,
            in_specs=[
                pl.BlockSpec((tr, D), lambda i: (i, 0)),   # x rows
                pl.BlockSpec((1, D), lambda i: (0, 0)),    # gamma (invariant)
                pl.BlockSpec((1, D), lambda i: (0, 0)),    # beta  (invariant)
                pl.BlockSpec((D, D), lambda i: (0, 0)),    # W     (invariant, bf16)
                pl.BlockSpec((1, D), lambda i: (0, 0)),    # bias  (invariant)
            ],
            out_specs=pl.BlockSpec((tr, D), lambda i: (i, 0)),
        ),
        compiler_params=pltpu.CompilerParams(
            dimension_semantics=("parallel",),          # megacore-shard rows (v7x)
            vmem_limit_bytes=48 * 1024 * 1024,          # headroom for large tiles
        ),
    )(x2, gamma2, beta2, w_m, b2)

    return out[:rows].reshape(B, N, D)


def prenorm_linear_ref(x, gamma, beta, w, b):
    """Pure-JAX reference mirroring the kernel numerics (f32 LN, bf16 matmul)."""
    xf = x.astype(jnp.float32)
    mean = jnp.mean(xf, axis=-1, keepdims=True)
    var = jnp.mean((xf - mean) ** 2, axis=-1, keepdims=True)
    y = (xf - mean) * jax.lax.rsqrt(var + EPS) * gamma + beta
    out = jnp.dot(y.astype(jnp.bfloat16), w.astype(jnp.bfloat16),
                  preferred_element_type=jnp.float32) + b
    return out.astype(x.dtype)


if __name__ == "__main__":
    key = jax.random.PRNGKey(0)
    kx, kw, kb, kx2 = jax.random.split(key, 4)

    # Small, lane-dense shapes: D is a multiple of 128.
    B, N, D = 2, 8, 128
    x = jax.random.normal(kx, (B, N, D), dtype=jnp.float32)

    # Deterministic params. nn.LayerNorm default init: gamma=1, beta=0.
    gamma = jnp.ones((D,), dtype=jnp.float32)
    beta = jnp.zeros((D,), dtype=jnp.float32)
    # fn = Linear(D, D) with deterministic random weights.
    w = jax.random.normal(kw, (D, D), dtype=jnp.float32) * 0.02
    b = jax.random.normal(kb, (D,), dtype=jnp.float32) * 0.02

    out = prenorm_linear(x, gamma, beta, w, b)
    out = jax.block_until_ready(out)
    ref = prenorm_linear_ref(x, gamma, beta, w, b)
    assert out.shape == (B, N, D)
    assert jnp.allclose(out, ref, atol=1e-3, rtol=1e-3), "mismatch vs reference"

    # Second case: row count not a multiple of the tile -> exercises cdiv + padding.
    B2, N2 = 2, 13
    x2 = jax.random.normal(kx2, (B2, N2, D), dtype=jnp.float32)
    out2 = jax.block_until_ready(prenorm_linear(x2, gamma, beta, w, b))
    ref2 = prenorm_linear_ref(x2, gamma, beta, w, b)
    assert out2.shape == (B2, N2, D)
    assert jnp.allclose(out2, ref2, atol=1e-3, rtol=1e-3), "mismatch vs reference (ragged rows)"

    print("KERNEL_OK")
</pallas_src>

<mosaic_0001>
module attributes {stable_mosaic.version = 11 : i64} {
  func.func @prenorm_kernel(%arg0: i32, %arg1: memref<16x128xf32, #tpu.memory_space<vmem>>, %arg2: memref<1x128xf32, #tpu.memory_space<vmem>>, %arg3: memref<1x128xf32, #tpu.memory_space<vmem>>, %arg4: memref<128x128xbf16, #tpu.memory_space<vmem>>, %arg5: memref<1x128xf32, #tpu.memory_space<vmem>>, %arg6: memref<16x128xf32, #tpu.memory_space<vmem>>) attributes {dimension_semantics = [#tpu.dimension_semantics<parallel>], iteration_bounds = array<i64: 1>, scalar_prefetch = 0 : i64, scratch_operands = 0 : i64, tpu.core_type = #tpu.core_type<tc>, window_params = [{transform_indices = @transform_0, window_bounds = array<i64: 16, 128>}, {pipeline_mode = #tpu.pipeline_mode<synchronous>, transform_indices = @transform_1, window_bounds = array<i64: 1, 128>}, {pipeline_mode = #tpu.pipeline_mode<synchronous>, transform_indices = @transform_2, window_bounds = array<i64: 1, 128>}, {pipeline_mode = #tpu.pipeline_mode<synchronous>, transform_indices = @transform_3, window_bounds = array<i64: 128, 128>}, {pipeline_mode = #tpu.pipeline_mode<synchronous>, transform_indices = @transform_4, window_bounds = array<i64: 1, 128>}, {transform_indices = @transform_5, window_bounds = array<i64: 16, 128>}]} {
    %c0 = arith.constant 0 : index
    %c0_0 = arith.constant 0 : index
    %0 = vector.load %arg1[%c0, %c0_0] : memref<16x128xf32, #tpu.memory_space<vmem>>, vector<16x128xf32>
    %cst = arith.constant dense<0.000000e+00> : vector<16xf32>
    %1 = vector.multi_reduction <add>, %0, %cst [1] : vector<16x128xf32> to vector<16xf32>
    %2 = vector.shape_cast %1 : vector<16xf32> to vector<16x1xf32>
    %cst_1 = arith.constant 1.280000e+02 : f32
    %3 = vector.broadcast %cst_1 : f32 to vector<16x1xf32>
    %4 = arith.divf %2, %3 : vector<16x1xf32>
    %5 = vector.broadcast %4 : vector<16x1xf32> to vector<16x128xf32>
    %6 = arith.subf %0, %5 : vector<16x128xf32>
    %7 = arith.mulf %6, %6 : vector<16x128xf32>
    %cst_2 = arith.constant dense<0.000000e+00> : vector<16xf32>
    %8 = vector.multi_reduction <add>, %7, %cst_2 [1] : vector<16x128xf32> to vector<16xf32>
    %9 = vector.shape_cast %8 : vector<16xf32> to vector<16x1xf32>
    %cst_3 = arith.constant 1.280000e+02 : f32
    %10 = vector.broadcast %cst_3 : f32 to vector<16x1xf32>
    %11 = arith.divf %9, %10 : vector<16x1xf32>
    %cst_4 = arith.constant 9.99999974E-6 : f32
    %12 = vector.broadcast %cst_4 : f32 to vector<16x1xf32>
    %13 = arith.addf %11, %12 : vector<16x1xf32>
    %14 = math.rsqrt %13 : vector<16x1xf32>
    %15 = vector.broadcast %14 : vector<16x1xf32> to vector<16x128xf32>
    %16 = arith.mulf %6, %15 : vector<16x128xf32>
    %c0_5 = arith.constant 0 : index
    %c0_6 = arith.constant 0 : index
    %17 = vector.load %arg2[%c0_5, %c0_6] : memref<1x128xf32, #tpu.memory_space<vmem>>, vector<1x128xf32>
    %18 = vector.broadcast %17 : vector<1x128xf32> to vector<16x128xf32>
    %19 = arith.mulf %16, %18 : vector<16x128xf32>
    %c0_7 = arith.constant 0 : index
    %c0_8 = arith.constant 0 : index
    %20 = vector.load %arg3[%c0_7, %c0_8] : memref<1x128xf32, #tpu.memory_space<vmem>>, vector<1x128xf32>
    %21 = vector.broadcast %20 : vector<1x128xf32> to vector<16x128xf32>
    %22 = arith.addf %19, %21 : vector<16x128xf32>
    %23 = arith.truncf %22 : vector<16x128xf32> to vector<16x128xbf16>
    %c0_9 = arith.constant 0 : index
    %c0_10 = arith.constant 0 : index
    %24 = vector.load %arg4[%c0_9, %c0_10] : memref<128x128xbf16, #tpu.memory_space<vmem>>, vector<128x128xbf16>
    %cst_11 = arith.constant dense<0.000000e+00> : vector<16x128xf32>
    %25 = tpu.matmul %23, %24, %cst_11 {dimension_numbers = #tpu.dot_dimension_numbers<[1], [0], [0], [1], [0, 0, 1, 1], [], []>} : vector<16x128xbf16>, vector<128x128xbf16>, vector<16x128xf32> -> vector<16x128xf32>
    %c0_12 = arith.constant 0 : index
    %c0_13 = arith.constant 0 : index
    %26 = vector.load %arg5[%c0_12, %c0_13] : memref<1x128xf32, #tpu.memory_space<vmem>>, vector<1x128xf32>
    %27 = vector.broadcast %26 : vector<1x128xf32> to vector<16x128xf32>
    %28 = arith.addf %25, %27 : vector<16x128xf32>
    %c0_14 = arith.constant 0 : index
    %c0_15 = arith.constant 0 : index
    %29 = vector.load %arg6[%c0_14, %c0_15] : memref<16x128xf32, #tpu.memory_space<vmem>>, vector<16x128xf32>
    tpu.vector_store %arg6[%c0_14, %c0_15], %28 {strides = array<i32>} : memref<16x128xf32, #tpu.memory_space<vmem>>, vector<16x128xf32>,
    return
  }
  func.func @transform_0(%arg0: i32) -> (i32, i32) {
    %c0_i32 = arith.constant 0 : i32
    %c0_i32_0 = arith.constant 0 : i32
    return %arg0, %c0_i32 : i32, i32
  }
  func.func @transform_1(%arg0: i32) -> (i32, i32) {
    %c0_i32 = arith.constant 0 : i32
    %c0_i32_0 = arith.constant 0 : i32
    %c0_i32_1 = arith.constant 0 : i32
    return %c0_i32, %c0_i32_0 : i32, i32
  }
  func.func @transform_2(%arg0: i32) -> (i32, i32) {
    %c0_i32 = arith.constant 0 : i32
    %c0_i32_0 = arith.constant 0 : i32
    %c0_i32_1 = arith.constant 0 : i32
    return %c0_i32, %c0_i32_0 : i32, i32
  }
  func.func @transform_3(%arg0: i32) -> (i32, i32) {
    %c0_i32 = arith.constant 0 : i32
    %c0_i32_0 = arith.constant 0 : i32
    %c0_i32_1 = arith.constant 0 : i32
    return %c0_i32, %c0_i32_0 : i32, i32
  }
  func.func @transform_4(%arg0: i32) -> (i32, i32) {
    %c0_i32 = arith.constant 0 : i32
    %c0_i32_0 = arith.constant 0 : i32
    %c0_i32_1 = arith.constant 0 : i32
    return %c0_i32, %c0_i32_0 : i32, i32
  }
  func.func @transform_5(%arg0: i32) -> (i32, i32) {
    %c0_i32 = arith.constant 0 : i32
    %c0_i32_0 = arith.constant 0 : i32
    return %arg0, %c0_i32 : i32, i32
  }
}

</mosaic_0001>

<llo_original>
// kernel: prenorm_linear.1
$region0: #{prenorm_linear.1}
  #allocation0 [shape = 'u32[]', space=smem, size = 0x4, offset = 0x4, fixed_abs, tag = 'smem constant byte address 0x4 - core index']
  #allocation1 [shape = 'u32[72,128]{1,0:T(1,128)}', space=vmem, size = 0x9000, scoped, tag = 'internal scratch']
  %s0 = inlined_call_operand.vmem [shape: f32[16,128], index: 0, kind: input, shape index: {}]
  %s1 = inlined_call_operand.vmem [shape: f32[1,128], index: 1, kind: input, shape index: {}]
  %s2 = inlined_call_operand.vmem [shape: f32[1,128], index: 2, kind: input, shape index: {}]
  %s3 = inlined_call_operand.vmem [shape: bf16[128,128], index: 3, kind: input, shape index: {}]
  %s4 = inlined_call_operand.vmem [shape: f32[1,128], index: 4, kind: input, shape index: {}]
  %s5 = inlined_call_operand.hbm [shape: f32[16,128], index: 5, kind: output, shape index: {}]
  %s6 = sld [smem:[#allocation0]]
  $region30: #{prenorm_linear.1} parent=0
    _
  %s8 = ssub.s32 1, %s6
  %s9 = scalar_select 0, %s8, %s6
  $region1: #{prenorm_linear.1} parent=0
    #allocation2 [shape = 'u8[8192]{0}', space=vmem, size = 0x2000, scoped, tag = 'output window, operand 0, single buffered']
    #allocation3 [shape = 's32[1]{0}', space=sflag, size = 0x4, scoped, tag = 'scoped memory for prenorm_linear.1']
    %10 = vsyncpa [#allocation3], 0
    // Predicated region
    $region2: #{prenorm_linear.1} parent=1 // pred_check
      _
    $region3: #{prenorm_linear.1} parent=1 // pred_check_branch
      %12 = sbr.rel (0) target = $region5
    $region4: #{prenorm_linear.1} parent=1 // pred_region
      _
    $region5: #{prenorm_linear.1} parent=1 // pred_fallthru
      _
    // Predicated region
    $region6: #{prenorm_linear.1} parent=1 // pred_check
      _
    $region7: #{prenorm_linear.1} parent=1 // pred_check_branch
      %14 = sbr.rel (0) target = $region9
    $region8: #{prenorm_linear.1} parent=1 // pred_region
      _
    $region9: #{prenorm_linear.1} parent=1 // pred_fallthru
      _
    // Predicated region
    $region10: #{prenorm_linear.1} parent=1 // pred_check
      _
    $region11: #{prenorm_linear.1} parent=1 // pred_check_branch
      %16 = sbr.rel (0) target = $region13
    $region12: #{prenorm_linear.1} parent=1 // pred_region
      _
    $region13: #{prenorm_linear.1} parent=1 // pred_fallthru
      _
    // Predicated region
    $region14: #{prenorm_linear.1} parent=1 // pred_check
      _
    $region15: #{prenorm_linear.1} parent=1 // pred_check_branch
      %18 = sbr.rel (0) target = $region17
    $region16: #{prenorm_linear.1} parent=1 // pred_region
      _
    $region17: #{prenorm_linear.1} parent=1 // pred_fallthru
      _
    // Predicated region
    $region18: #{prenorm_linear.1} parent=1 // pred_check
      _
    $region19: #{prenorm_linear.1} parent=1 // pred_check_branch
      %20 = sbr.rel (0) target = $region21
    $region20: #{prenorm_linear.1} parent=1 // pred_region
      _
    $region21: #{prenorm_linear.1} parent=1 // pred_fallthru
      _
    %v21 = vld [vmem:[%s0] sm:$0xff]
    %v22 = vld [vmem:[%s0 + $0x8] sm:$0xff]
    %23 = vadd.xlane.f32.xlu0 %v21
    %v24 = vpop.xlane.xlu0 %23
    %25 = vadd.xlane.f32.xlu0 %v22
    %v26 = vpop.xlane.xlu0 %25
    %v27 = vrcp.pop 128.0
    %v28 = vmul.f32 128.0, %v27
    %v29 = vsub.f32 1.0, %v28
    %v30 = vmul.f32 %v27, %v29
    %v31 = vadd.f32 %v27, %v30
    %vm32 = vweird.f32 %v27
    %v33 = vsel %vm32, %v27, %v31
    %v34 = vmul.f32 %v24, %v33
    %v35 = vmul.f32 %v26, %v33
    %v36 = vsub.f32 %v21, %v34
    %v37 = vsub.f32 %v22, %v35
    %v38 = vmul.f32 %v36, %v36
    %v39 = vmul.f32 %v37, %v37
    %40 = vadd.xlane.f32.xlu0 %v38
    %v41 = vpop.xlane.xlu0 %40
    %42 = vadd.xlane.f32.xlu0 %v39
    %v43 = vpop.xlane.xlu0 %42
    %v44 = vmul.f32 %v41, %v33
    %v45 = vmul.f32 %v43, %v33
    %v46 = vadd.f32 %v44, 1e-05
    %v47 = vadd.f32 %v45, 1e-05
    %v48 = vrsqrt.pop %v46
    %v49 = vmul.f32 %v48, %v46
    %v50 = vmul.f32 %v49, %v48
    %v51 = vmul.f32 0.5, %v50
    %v52 = vsub.f32 1.5, %v51
    %v53 = vmul.f32 %v48, %v52
    %vm54 = vweird.f32 %v46
    %vm55 = vweird.f32 %v48
    %vm56 = vmor %vm54, %vm55
    %v57 = vsel %vm56, %v48, %v53
    %v58 = vrsqrt.pop %v47
    %v59 = vmul.f32 %v58, %v47
    %v60 = vmul.f32 %v59, %v58
    %v61 = vmul.f32 0.5, %v60
    %v62 = vsub.f32 1.5, %v61
    %v63 = vmul.f32 %v58, %v62
    %vm64 = vweird.f32 %v47
    %vm65 = vweird.f32 %v58
    %vm66 = vmor %vm64, %vm65
    %v67 = vsel %vm66, %v58, %v63
    %v68 = vmul.f32 %v36, %v57
    %v69 = vmul.f32 %v37, %v67
    %v70 = vld [vmem:[%s1] sm:$0x1]
    %v72 = vperm.slane %v70, 0
    %v74 = vmul.f32 %v68, %v72
    %v75 = vmul.f32 %v69, %v72
    %v76 = vld [vmem:[%s2] sm:$0x1]
    %v78 = vperm.slane %v76, 0
    %v80 = vadd.f32 %v74, %v78
    %v81 = vadd.f32 %v75, %v78
    %v82 = vpack.c.bf16 %v81, %v80
    %v83 = vld [vmem:[%s3] sm:$0xf]
    %v84 = vld [vmem:[%s3 + $0x4] sm:$0xf]
    %v85 = vld [vmem:[%s3 + $0x8] sm:$0xf]
    %v86 = vld [vmem:[%s3 + $0xc] sm:$0xf]
    %v87 = vld [vmem:[%s3 + $0x10] sm:$0xf]
    %v88 = vld [vmem:[%s3 + $0x14] sm:$0xf]
    %v89 = vld [vmem:[%s3 + $0x18] sm:$0xf]
    %v90 = vld [vmem:[%s3 + $0x1c] sm:$0xf]
    %v91 = vld [vmem:[%s3 + $0x20] sm:$0xf]
    %v92 = vld [vmem:[%s3 + $0x24] sm:$0xf]
    %v93 = vld [vmem:[%s3 + $0x28] sm:$0xf]
    %v94 = vld [vmem:[%s3 + $0x2c] sm:$0xf]
    %v95 = vld [vmem:[%s3 + $0x30] sm:$0xf]
    %v96 = vld [vmem:[%s3 + $0x34] sm:$0xf]
    %v97 = vld [vmem:[%s3 + $0x38] sm:$0xf]
    %v98 = vld [vmem:[%s3 + $0x3c] sm:$0xf]
    %v99 = vld [vmem:[%s4] sm:$0x1]
    %v101 = vperm.slane %v99, 0
    %v119 = vunpack.c.l.b16 %v83
    %v120 = vunpack.c.l.b16 %v84
    %v121 = vunpack.c.l.b16 %v85
    %v122 = vunpack.c.l.b16 %v86
    %v123 = vunpack.c.l.b16 %v87
    %v124 = vunpack.c.l.b16 %v88
    %v125 = vunpack.c.l.b16 %v89
    %v126 = vunpack.c.l.b16 %v90
    %v127 = vunpack.c.l.b16 %v91
    %v128 = vunpack.c.l.b16 %v92
    %v129 = vunpack.c.l.b16 %v93
    %v130 = vunpack.c.l.b16 %v94
    %v131 = vunpack.c.l.b16 %v95
    %v132 = vunpack.c.l.b16 %v96
    %v133 = vunpack.c.l.b16 %v97
    %v134 = vunpack.c.l.b16 %v98
    %v135 = vpack.c.b16 %v120, %v119
    %v136 = vpack.c.b16 %v122, %v121
    %v137 = vpack.c.b16 %v124, %v123
    %v138 = vpack.c.b16 %v126, %v125
    %v139 = vpack.c.b16 %v128, %v127
    %v140 = vpack.c.b16 %v130, %v129
    %v141 = vpack.c.b16 %v132, %v131
    %v142 = vpack.c.b16 %v134, %v133
    %151 = vmatpush.bf16.msra.mxu0 %v142
    %152 = vmatpush.bf16.msra.mxu0 %v141
    %153 = vmatpush.bf16.msra.mxu0 %v140
    %154 = vmatpush.bf16.msra.mxu0 %v139
    %155 = vmatpush.bf16.msra.mxu0 %v138
    %156 = vmatpush.bf16.msra.mxu0 %v137
    %157 = vmatpush.bf16.msra.mxu0 %v136
    %158 = vmatpush.bf16.msra.mxu0 %v135
    %159 = vmatmul.bf16.gmra.mxu0 %v82
    %v160 = vpop.f32.mrf.mxu0
    %v161 = vadd.f32 %v101, %v160
    %v162 = vpop.f32.mrf.mxu0
    %v163 = vadd.f32 %v101, %v162
    %164 = vdwg.mxu0
    %165 = vst [vmem:[#allocation2] sm:$0xff] %v161
    %166 = vst [vmem:[#allocation2 + $0x8] sm:$0xff] %v163
    // Predicated region
    $region22: #{prenorm_linear.1} parent=1 // pred_check
      _
    $region23: #{prenorm_linear.1} parent=1 // pred_check_branch
      %168 = sbr.rel (0) target = $region25
    $region24: #{prenorm_linear.1} parent=1 // pred_region
      %170 = vsyncadd [#allocation3], 0
      %s171 = sshll.u32 [#allocation2], 4
      %s172 = int_to_ptr.vmem [resolvable:$true] %s171
      %s173 = sshll.u32 %s5, 4
      %s174 = int_to_ptr.hbm [resolvable:$true] %s173
      %179 = dma.vmem_to_hbm [thread:$0]  %s172, 256, %s174, [#allocation3], 128, 128, 8
    $region25: #{prenorm_linear.1} parent=1 // pred_fallthru
      _
    // Predicated region
    $region26: #{prenorm_linear.1} parent=1 // pred_check
      _
    $region27: #{prenorm_linear.1} parent=1 // pred_check_branch
      %181 = sbr.rel (0) target = $region29
    $region28: #{prenorm_linear.1} parent=1 // pred_region
      %183 = dma.done [#allocation3], 256
    $region29: #{prenorm_linear.1} parent=1 // pred_fallthru
      _
    %184 = vsyncpa [#allocation3], 1

</llo_original>
